<compile_context>
chip_gen: v7x
topology: tpu7x:2x2x1
jax: 0.10.0
libtpu: 0.0.40
codegen_flags: <defaults>
</compile_context>

<pallas_src>
import functools

import jax
import jax.numpy as jnp
import numpy as np
from jax.experimental import pallas as pl
from jax.experimental.pallas import tpu as pltpu


def _adaptive_group_conv_kernel(wb_ref, x_ref, o_ref, *,
                                CIN, KH, KW, H, W, PAD, NROWS):
    """Whole problem in one invocation (no grid).

    wb_ref : VMEM [NROWS, KH*KW*CIN + 1] f32  per-row tap weights; bias in last column
    x_ref  : VMEM [CIN, NROWS, Hp*W + KH-1]   H-zero-padded, flattened, per-output-
                                              channel-replicated input (+ flat guards)
    o_ref  : VMEM [NROWS, H*W]                lane-dense output (H*W on the lane axis)
    """
    HW = H * W
    T = KH * KW * CIN
    wb = wb_ref[...]                                             # (NROWS, T+1) f32

    # Column index of every output lane (W-boundary masks; one distinct mask per kw).
    j_idx = jax.lax.broadcasted_iota(jnp.int32, (1, HW), dimension=1) % W

    # Bias-initialised, lane-dense f32 accumulator.
    acc = jnp.broadcast_to(wb[:, T:T + 1], (NROWS, HW))

    for kw in range(KW):                       # tiny static loops -> fully unrolled
        dw = kw - PAD
        if dw < 0:
            valid = j_idx >= -dw               # left columns would read the previous row
        elif dw > 0:
            valid = j_idx < (W - dw)           # right columns would read the next row
        else:
            valid = None                       # centre column: no wrap possible
        for kh in range(KH):
            start = kh * W + kw                # static contiguous lane-slice offset
            tap = None
            for c in range(CIN):
                patch = x_ref[c, :, start:start + HW].astype(jnp.float32)   # (NROWS, HW)
                col = (kh * KW + kw) * CIN + c
                contrib = patch * wb[:, col:col + 1]   # (NROWS,1) lane-broadcast weight
                tap = contrib if tap is None else tap + contrib
            if valid is not None:
                tap = jnp.where(valid, tap, 0.0)       # zero the row-wrapped lanes
            acc = acc + tap

    o_ref[...] = acc.astype(o_ref.dtype)


def adaptive_group_conv(x_nchw, weight_oihw, bias, output_channels_list,
                        ksize, stride, padding):
    """Forward pass of AdaptiveGroupConv.

    x_nchw      : [N, C, H, W]                     (torch NCHW)
    weight_oihw : [G*max_ch, C//G, ksize, ksize]   (torch grouped Conv2d layout)
    bias        : [G*max_ch]
    Returns a list of arrays [N, ch_i, Hout, Wout] (NCHW), one per group.
    """
    assert stride == 1                      # TODO(synk): strided conv not implemented
    assert 2 * padding == ksize - 1         # TODO(synk): only 'same' convs supported
    N, C, H, W = x_nchw.shape
    G = len(output_channels_list)
    max_ch = max(output_channels_list)
    cin_g = C // G
    KH = KW = ksize
    HW = H * W
    Hp = H + 2 * padding
    nrows = N * G * max_ch

    # ---- layout plumbing in plain JAX (HBM-side, tiny) ----------------------
    # Input: zero-pad in H only, flatten (Hp, W) onto the lane axis, replicate per
    # output channel so patch rows line up 1:1 with accumulator rows, add ksize-1
    # flat guard elements so every tap slice stays in-bounds.
    xg = x_nchw.reshape(N, G, cin_g, H, W)
    xg = jnp.pad(xg, ((0, 0), (0, 0), (0, 0), (padding, padding), (0, 0)))
    xg = xg.reshape(N, G, cin_g, Hp * W)
    xg = jnp.broadcast_to(xg[:, :, None], (N, G, max_ch, cin_g, Hp * W))
    xg = jnp.transpose(xg, (3, 0, 1, 2, 4)).reshape(cin_g, nrows, Hp * W)
    x_in = jnp.pad(xg, ((0, 0), (0, 0), (padding, ksize - 1 - padding)))

    # Weights: torch [G*max_ch, cin_g, KH, KW] -> rows (n,g,m) / cols (kh,kw,c), +bias.
    w = weight_oihw.reshape(G, max_ch, cin_g, KH, KW)
    w = jnp.transpose(w, (0, 1, 3, 4, 2)).reshape(G * max_ch, KH * KW * cin_g)
    wb = jnp.concatenate([w, bias.reshape(G * max_ch, 1)], axis=1)
    wb = jnp.tile(wb, (N, 1)).astype(jnp.float32)        # (nrows, KH*KW*cin_g + 1)

    kernel = functools.partial(
        _adaptive_group_conv_kernel,
        CIN=cin_g, KH=KH, KW=KW, H=H, W=W, PAD=padding, NROWS=nrows)

    y = pl.pallas_call(
        kernel,
        out_shape=jax.ShapeDtypeStruct((nrows, HW), x_nchw.dtype),
        in_specs=[pl.BlockSpec(memory_space=pltpu.MemorySpace.VMEM),    # wb
                  pl.BlockSpec(memory_space=pltpu.MemorySpace.VMEM)],   # x_in
        out_specs=pl.BlockSpec(memory_space=pltpu.MemorySpace.VMEM),
    )(wb, x_in)

    # (nrows, H*W) -> (N, G, max_ch, H, W); then per-group channel slicing
    # (matches y[:, i*max_ch : i*max_ch + ch] in the torch module).
    y = y.reshape(N, G, max_ch, H, W)
    return [y[:, i, :ch] for i, ch in enumerate(output_channels_list)]


def _reference(x_nchw, weight_oihw, bias, output_channels_list, padding):
    G = len(output_channels_list)
    max_ch = max(output_channels_list)
    y = jax.lax.conv_general_dilated(
        x_nchw, weight_oihw, window_strides=(1, 1),
        padding=[(padding, padding), (padding, padding)],
        dimension_numbers=("NCHW", "OIHW", "NCHW"),
        feature_group_count=G)
    y = y + bias[None, :, None, None]
    return [y[:, i * max_ch:i * max_ch + ch] for i, ch in enumerate(output_channels_list)]


if __name__ == "__main__":
    # Module config: AdaptiveGroupConv(input_channels=4, output_channels_list=[2, 3],
    #                                  ksize=3, stride=1, padding=1, bias=True)
    N, C, H, W = 2, 4, 16, 16
    output_channels_list = [2, 3]
    ksize, stride, padding = 3, 1, 1
    G = len(output_channels_list)
    max_ch = max(output_channels_list)
    cin_g = C // G

    key = jax.random.PRNGKey(0)
    kx, kw_, kb = jax.random.split(key, 3)

    x = jax.random.normal(kx, (N, C, H, W), dtype=jnp.float32)
    # kaiming-normal-like init: std = sqrt(2 / fan_in), fan_in = cin_g * k * k
    fan_in = cin_g * ksize * ksize
    weight = jax.random.normal(kw_, (G * max_ch, cin_g, ksize, ksize),
                               dtype=jnp.float32) * jnp.sqrt(2.0 / fan_in)
    bias = 0.1 * jax.random.normal(kb, (G * max_ch,), dtype=jnp.float32)

    outs = adaptive_group_conv(x, weight, bias, output_channels_list,
                               ksize, stride, padding)
    outs = [jax.block_until_ready(o) for o in outs]

    refs = _reference(x, weight, bias, output_channels_list, padding)
    for o, r in zip(outs, refs):
        assert o.shape == r.shape, (o.shape, r.shape)
        np.testing.assert_allclose(np.asarray(o), np.asarray(r), rtol=1e-4, atol=1e-4)

    print("KERNEL_OK")
</pallas_src>

<mosaic_0001>
module attributes {stable_mosaic.version = 11 : i64} {
  func.func @_adaptive_group_conv_kernel(%arg0: memref<12x19xf32, #tpu.memory_space<vmem>>, %arg1: memref<2x12x290xf32, #tpu.memory_space<vmem>>, %arg2: memref<12x256xf32, #tpu.memory_space<vmem>>) attributes {dimension_semantics = [], scalar_prefetch = 0 : i64, scratch_operands = 0 : i64, tpu.core_type = #tpu.core_type<tc>} {
    %c0 = arith.constant 0 : index
    %c0_0 = arith.constant 0 : index
    %0 = vector.load %arg0[%c0, %c0_0] : memref<12x19xf32, #tpu.memory_space<vmem>>, vector<12x19xf32>
    %1 = tpu.iota {dimensions = array<i32: 1>} : vector<1x256xi32>
    %c16_i32 = arith.constant 16 : i32
    %c0_i32 = arith.constant 0 : i32
    %2 = arith.cmpi eq, %c16_i32, %c0_i32 : i32
    %c1_i32 = arith.constant 1 : i32
    %3 = arith.select %2, %c1_i32, %c16_i32 : i32
    %4 = vector.broadcast %3 : i32 to vector<1x256xi32>
    %5 = arith.remsi %1, %4 : vector<1x256xi32>
    %c0_i32_1 = arith.constant 0 : i32
    %6 = vector.broadcast %c0_i32_1 : i32 to vector<1x256xi32>
    %7 = arith.cmpi ne, %5, %6 : vector<1x256xi32>
    %c0_i32_2 = arith.constant 0 : i32
    %8 = vector.broadcast %c0_i32_2 : i32 to vector<1x256xi32>
    %9 = arith.cmpi slt, %5, %8 : vector<1x256xi32>
    %c0_i32_3 = arith.constant 0 : i32
    %10 = arith.cmpi slt, %3, %c0_i32_3 : i32
    %11 = vector.broadcast %10 : i1 to vector<1x256xi1>
    %12 = vector.broadcast %11 : vector<1x256xi1> to vector<1x256xi1>
    %13 = arith.xori %9, %12 : vector<1x256xi1>
    %14 = arith.andi %13, %7 : vector<1x256xi1>
    %15 = vector.broadcast %3 : i32 to vector<1x256xi32>
    %16 = arith.addi %5, %15 : vector<1x256xi32>
    %17 = arith.select %14, %16, %5 : vector<1x256xi1>, vector<1x256xi32>
    %18 = vector.extract_strided_slice %0 {offsets = [0, 18], sizes = [12, 1], strides = [1, 1]} : vector<12x19xf32> to vector<12x1xf32>
    %19 = vector.shape_cast %18 : vector<12x1xf32> to vector<12x1xf32>
    %20 = vector.broadcast %19 : vector<12x1xf32> to vector<12x256xf32>
    %c1_i32_4 = arith.constant 1 : i32
    %21 = vector.broadcast %c1_i32_4 : i32 to vector<1x256xi32>
    %22 = arith.cmpi sge, %17, %21 : vector<1x256xi32>
    %c0_5 = arith.constant 0 : index
    %c0_6 = arith.constant 0 : index
    %c0_7 = arith.constant 0 : index
    %23 = vector.load %arg1[%c0_5, %c0_6, %c0_7] : memref<2x12x290xf32, #tpu.memory_space<vmem>>, vector<1x12x256xf32>
    %24 = vector.shape_cast %23 : vector<1x12x256xf32> to vector<12x256xf32>
    %25 = vector.extract_strided_slice %0 {offsets = [0, 0], sizes = [12, 1], strides = [1, 1]} : vector<12x19xf32> to vector<12x1xf32>
    %26 = vector.broadcast %25 : vector<12x1xf32> to vector<12x256xf32>
    %27 = arith.mulf %24, %26 : vector<12x256xf32>
    %c1 = arith.constant 1 : index
    %c0_8 = arith.constant 0 : index
    %c0_9 = arith.constant 0 : index
    %28 = vector.load %arg1[%c1, %c0_8, %c0_9] : memref<2x12x290xf32, #tpu.memory_space<vmem>>, vector<1x12x256xf32>
    %29 = vector.shape_cast %28 : vector<1x12x256xf32> to vector<12x256xf32>
    %30 = vector.extract_strided_slice %0 {offsets = [0, 1], sizes = [12, 1], strides = [1, 1]} : vector<12x19xf32> to vector<12x1xf32>
    %31 = vector.broadcast %30 : vector<12x1xf32> to vector<12x256xf32>
    %32 = arith.mulf %29, %31 : vector<12x256xf32>
    %33 = arith.addf %27, %32 : vector<12x256xf32>
    %cst = arith.constant 0.000000e+00 : f32
    %34 = vector.shape_cast %22 : vector<1x256xi1> to vector<1x256xi1>
    %35 = vector.broadcast %34 : vector<1x256xi1> to vector<12x256xi1>
    %36 = vector.broadcast %cst : f32 to vector<12x256xf32>
    %37 = arith.select %35, %33, %36 : vector<12x256xi1>, vector<12x256xf32>
    %38 = arith.addf %20, %37 : vector<12x256xf32>
    %c0_10 = arith.constant 0 : index
    %c0_11 = arith.constant 0 : index
    %c16 = arith.constant 16 : index
    %39 = vector.load %arg1[%c0_10, %c0_11, %c16] : memref<2x12x290xf32, #tpu.memory_space<vmem>>, vector<1x12x256xf32>
    %40 = vector.shape_cast %39 : vector<1x12x256xf32> to vector<12x256xf32>
    %41 = vector.extract_strided_slice %0 {offsets = [0, 6], sizes = [12, 1], strides = [1, 1]} : vector<12x19xf32> to vector<12x1xf32>
    %42 = vector.broadcast %41 : vector<12x1xf32> to vector<12x256xf32>
    %43 = arith.mulf %40, %42 : vector<12x256xf32>
    %c1_12 = arith.constant 1 : index
    %c0_13 = arith.constant 0 : index
    %c16_14 = arith.constant 16 : index
    %44 = vector.load %arg1[%c1_12, %c0_13, %c16_14] : memref<2x12x290xf32, #tpu.memory_space<vmem>>, vector<1x12x256xf32>
    %45 = vector.shape_cast %44 : vector<1x12x256xf32> to vector<12x256xf32>
    %46 = vector.extract_strided_slice %0 {offsets = [0, 7], sizes = [12, 1], strides = [1, 1]} : vector<12x19xf32> to vector<12x1xf32>
    %47 = vector.broadcast %46 : vector<12x1xf32> to vector<12x256xf32>
    %48 = arith.mulf %45, %47 : vector<12x256xf32>
    %49 = arith.addf %43, %48 : vector<12x256xf32>
    %cst_15 = arith.constant 0.000000e+00 : f32
    %50 = vector.shape_cast %22 : vector<1x256xi1> to vector<1x256xi1>
    %51 = vector.broadcast %50 : vector<1x256xi1> to vector<12x256xi1>
    %52 = vector.broadcast %cst_15 : f32 to vector<12x256xf32>
    %53 = arith.select %51, %49, %52 : vector<12x256xi1>, vector<12x256xf32>
    %54 = arith.addf %38, %53 : vector<12x256xf32>
    %c0_16 = arith.constant 0 : index
    %c0_17 = arith.constant 0 : index
    %c32 = arith.constant 32 : index
    %55 = vector.load %arg1[%c0_16, %c0_17, %c32] : memref<2x12x290xf32, #tpu.memory_space<vmem>>, vector<1x12x256xf32>
    %56 = vector.shape_cast %55 : vector<1x12x256xf32> to vector<12x256xf32>
    %57 = vector.extract_strided_slice %0 {offsets = [0, 12], sizes = [12, 1], strides = [1, 1]} : vector<12x19xf32> to vector<12x1xf32>
    %58 = vector.broadcast %57 : vector<12x1xf32> to vector<12x256xf32>
    %59 = arith.mulf %56, %58 : vector<12x256xf32>
    %c1_18 = arith.constant 1 : index
    %c0_19 = arith.constant 0 : index
    %c32_20 = arith.constant 32 : index
    %60 = vector.load %arg1[%c1_18, %c0_19, %c32_20] : memref<2x12x290xf32, #tpu.memory_space<vmem>>, vector<1x12x256xf32>
    %61 = vector.shape_cast %60 : vector<1x12x256xf32> to vector<12x256xf32>
    %62 = vector.extract_strided_slice %0 {offsets = [0, 13], sizes = [12, 1], strides = [1, 1]} : vector<12x19xf32> to vector<12x1xf32>
    %63 = vector.broadcast %62 : vector<12x1xf32> to vector<12x256xf32>
    %64 = arith.mulf %61, %63 : vector<12x256xf32>
    %65 = arith.addf %59, %64 : vector<12x256xf32>
    %cst_21 = arith.constant 0.000000e+00 : f32
    %66 = vector.shape_cast %22 : vector<1x256xi1> to vector<1x256xi1>
    %67 = vector.broadcast %66 : vector<1x256xi1> to vector<12x256xi1>
    %68 = vector.broadcast %cst_21 : f32 to vector<12x256xf32>
    %69 = arith.select %67, %65, %68 : vector<12x256xi1>, vector<12x256xf32>
    %70 = arith.addf %54, %69 : vector<12x256xf32>
    %c0_22 = arith.constant 0 : index
    %c0_23 = arith.constant 0 : index
    %c1_24 = arith.constant 1 : index
    %71 = vector.load %arg1[%c0_22, %c0_23, %c1_24] : memref<2x12x290xf32, #tpu.memory_space<vmem>>, vector<1x12x256xf32>
    %72 = vector.shape_cast %71 : vector<1x12x256xf32> to vector<12x256xf32>
    %73 = vector.extract_strided_slice %0 {offsets = [0, 2], sizes = [12, 1], strides = [1, 1]} : vector<12x19xf32> to vector<12x1xf32>
    %74 = vector.broadcast %73 : vector<12x1xf32> to vector<12x256xf32>
    %75 = arith.mulf %72, %74 : vector<12x256xf32>
    %c1_25 = arith.constant 1 : index
    %c0_26 = arith.constant 0 : index
    %c1_27 = arith.constant 1 : index
    %76 = vector.load %arg1[%c1_25, %c0_26, %c1_27] : memref<2x12x290xf32, #tpu.memory_space<vmem>>, vector<1x12x256xf32>
    %77 = vector.shape_cast %76 : vector<1x12x256xf32> to vector<12x256xf32>
    %78 = vector.extract_strided_slice %0 {offsets = [0, 3], sizes = [12, 1], strides = [1, 1]} : vector<12x19xf32> to vector<12x1xf32>
    %79 = vector.broadcast %78 : vector<12x1xf32> to vector<12x256xf32>
    %80 = arith.mulf %77, %79 : vector<12x256xf32>
    %81 = arith.addf %75, %80 : vector<12x256xf32>
    %82 = arith.addf %70, %81 : vector<12x256xf32>
    %c0_28 = arith.constant 0 : index
    %c0_29 = arith.constant 0 : index
    %c17 = arith.constant 17 : index
    %83 = vector.load %arg1[%c0_28, %c0_29, %c17] : memref<2x12x290xf32, #tpu.memory_space<vmem>>, vector<1x12x256xf32>
    %84 = vector.shape_cast %83 : vector<1x12x256xf32> to vector<12x256xf32>
    %85 = vector.extract_strided_slice %0 {offsets = [0, 8], sizes = [12, 1], strides = [1, 1]} : vector<12x19xf32> to vector<12x1xf32>
    %86 = vector.broadcast %85 : vector<12x1xf32> to vector<12x256xf32>
    %87 = arith.mulf %84, %86 : vector<12x256xf32>
    %c1_30 = arith.constant 1 : index
    %c0_31 = arith.constant 0 : index
    %c17_32 = arith.constant 17 : index
    %88 = vector.load %arg1[%c1_30, %c0_31, %c17_32] : memref<2x12x290xf32, #tpu.memory_space<vmem>>, vector<1x12x256xf32>
    %89 = vector.shape_cast %88 : vector<1x12x256xf32> to vector<12x256xf32>
    %90 = vector.extract_strided_slice %0 {offsets = [0, 9], sizes = [12, 1], strides = [1, 1]} : vector<12x19xf32> to vector<12x1xf32>
    %91 = vector.broadcast %90 : vector<12x1xf32> to vector<12x256xf32>
    %92 = arith.mulf %89, %91 : vector<12x256xf32>
    %93 = arith.addf %87, %92 : vector<12x256xf32>
    %94 = arith.addf %82, %93 : vector<12x256xf32>
    %c0_33 = arith.constant 0 : index
    %c0_34 = arith.constant 0 : index
    %c33 = arith.constant 33 : index
    %95 = vector.load %arg1[%c0_33, %c0_34, %c33] : memref<2x12x290xf32, #tpu.memory_space<vmem>>, vector<1x12x256xf32>
    %96 = vector.shape_cast %95 : vector<1x12x256xf32> to vector<12x256xf32>
    %97 = vector.extract_strided_slice %0 {offsets = [0, 14], sizes = [12, 1], strides = [1, 1]} : vector<12x19xf32> to vector<12x1xf32>
    %98 = vector.broadcast %97 : vector<12x1xf32> to vector<12x256xf32>
    %99 = arith.mulf %96, %98 : vector<12x256xf32>
    %c1_35 = arith.constant 1 : index
    %c0_36 = arith.constant 0 : index
    %c33_37 = arith.constant 33 : index
    %100 = vector.load %arg1[%c1_35, %c0_36, %c33_37] : memref<2x12x290xf32, #tpu.memory_space<vmem>>, vector<1x12x256xf32>
    %101 = vector.shape_cast %100 : vector<1x12x256xf32> to vector<12x256xf32>
    %102 = vector.extract_strided_slice %0 {offsets = [0, 15], sizes = [12, 1], strides = [1, 1]} : vector<12x19xf32> to vector<12x1xf32>
    %103 = vector.broadcast %102 : vector<12x1xf32> to vector<12x256xf32>
    %104 = arith.mulf %101, %103 : vector<12x256xf32>
    %105 = arith.addf %99, %104 : vector<12x256xf32>
    %106 = arith.addf %94, %105 : vector<12x256xf32>
    %c15_i32 = arith.constant 15 : i32
    %107 = vector.broadcast %c15_i32 : i32 to vector<1x256xi32>
    %108 = arith.cmpi slt, %17, %107 : vector<1x256xi32>
    %c0_38 = arith.constant 0 : index
    %c0_39 = arith.constant 0 : index
    %c2 = arith.constant 2 : index
    %109 = vector.load %arg1[%c0_38, %c0_39, %c2] : memref<2x12x290xf32, #tpu.memory_space<vmem>>, vector<1x12x256xf32>
    %110 = vector.shape_cast %109 : vector<1x12x256xf32> to vector<12x256xf32>
    %111 = vector.extract_strided_slice %0 {offsets = [0, 4], sizes = [12, 1], strides = [1, 1]} : vector<12x19xf32> to vector<12x1xf32>
    %112 = vector.broadcast %111 : vector<12x1xf32> to vector<12x256xf32>
    %113 = arith.mulf %110, %112 : vector<12x256xf32>
    %c1_40 = arith.constant 1 : index
    %c0_41 = arith.constant 0 : index
    %c2_42 = arith.constant 2 : index
    %114 = vector.load %arg1[%c1_40, %c0_41, %c2_42] : memref<2x12x290xf32, #tpu.memory_space<vmem>>, vector<1x12x256xf32>
    %115 = vector.shape_cast %114 : vector<1x12x256xf32> to vector<12x256xf32>
    %116 = vector.extract_strided_slice %0 {offsets = [0, 5], sizes = [12, 1], strides = [1, 1]} : vector<12x19xf32> to vector<12x1xf32>
    %117 = vector.broadcast %116 : vector<12x1xf32> to vector<12x256xf32>
    %118 = arith.mulf %115, %117 : vector<12x256xf32>
    %119 = arith.addf %113, %118 : vector<12x256xf32>
    %cst_43 = arith.constant 0.000000e+00 : f32
    %120 = vector.shape_cast %108 : vector<1x256xi1> to vector<1x256xi1>
    %121 = vector.broadcast %120 : vector<1x256xi1> to vector<12x256xi1>
    %122 = vector.broadcast %cst_43 : f32 to vector<12x256xf32>
    %123 = arith.select %121, %119, %122 : vector<12x256xi1>, vector<12x256xf32>
    %124 = arith.addf %106, %123 : vector<12x256xf32>
    %c0_44 = arith.constant 0 : index
    %c0_45 = arith.constant 0 : index
    %c18 = arith.constant 18 : index
    %125 = vector.load %arg1[%c0_44, %c0_45, %c18] : memref<2x12x290xf32, #tpu.memory_space<vmem>>, vector<1x12x256xf32>
    %126 = vector.shape_cast %125 : vector<1x12x256xf32> to vector<12x256xf32>
    %127 = vector.extract_strided_slice %0 {offsets = [0, 10], sizes = [12, 1], strides = [1, 1]} : vector<12x19xf32> to vector<12x1xf32>
    %128 = vector.broadcast %127 : vector<12x1xf32> to vector<12x256xf32>
    %129 = arith.mulf %126, %128 : vector<12x256xf32>
    %c1_46 = arith.constant 1 : index
    %c0_47 = arith.constant 0 : index
    %c18_48 = arith.constant 18 : index
    %130 = vector.load %arg1[%c1_46, %c0_47, %c18_48] : memref<2x12x290xf32, #tpu.memory_space<vmem>>, vector<1x12x256xf32>
    %131 = vector.shape_cast %130 : vector<1x12x256xf32> to vector<12x256xf32>
    %132 = vector.extract_strided_slice %0 {offsets = [0, 11], sizes = [12, 1], strides = [1, 1]} : vector<12x19xf32> to vector<12x1xf32>
    %133 = vector.broadcast %132 : vector<12x1xf32> to vector<12x256xf32>
    %134 = arith.mulf %131, %133 : vector<12x256xf32>
    %135 = arith.addf %129, %134 : vector<12x256xf32>
    %cst_49 = arith.constant 0.000000e+00 : f32
    %136 = vector.shape_cast %108 : vector<1x256xi1> to vector<1x256xi1>
    %137 = vector.broadcast %136 : vector<1x256xi1> to vector<12x256xi1>
    %138 = vector.broadcast %cst_49 : f32 to vector<12x256xf32>
    %139 = arith.select %137, %135, %138 : vector<12x256xi1>, vector<12x256xf32>
    %140 = arith.addf %124, %139 : vector<12x256xf32>
    %c0_50 = arith.constant 0 : index
    %c0_51 = arith.constant 0 : index
    %c34 = arith.constant 34 : index
    %141 = vector.load %arg1[%c0_50, %c0_51, %c34] : memref<2x12x290xf32, #tpu.memory_space<vmem>>, vector<1x12x256xf32>
    %142 = vector.shape_cast %141 : vector<1x12x256xf32> to vector<12x256xf32>
    %143 = vector.extract_strided_slice %0 {offsets = [0, 16], sizes = [12, 1], strides = [1, 1]} : vector<12x19xf32> to vector<12x1xf32>
    %144 = vector.broadcast %143 : vector<12x1xf32> to vector<12x256xf32>
    %145 = arith.mulf %142, %144 : vector<12x256xf32>
    %c1_52 = arith.constant 1 : index
    %c0_53 = arith.constant 0 : index
    %c34_54 = arith.constant 34 : index
    %146 = vector.load %arg1[%c1_52, %c0_53, %c34_54] : memref<2x12x290xf32, #tpu.memory_space<vmem>>, vector<1x12x256xf32>
    %147 = vector.shape_cast %146 : vector<1x12x256xf32> to vector<12x256xf32>
    %148 = vector.extract_strided_slice %0 {offsets = [0, 17], sizes = [12, 1], strides = [1, 1]} : vector<12x19xf32> to vector<12x1xf32>
    %149 = vector.broadcast %148 : vector<12x1xf32> to vector<12x256xf32>
    %150 = arith.mulf %147, %149 : vector<12x256xf32>
    %151 = arith.addf %145, %150 : vector<12x256xf32>
    %cst_55 = arith.constant 0.000000e+00 : f32
    %152 = vector.shape_cast %108 : vector<1x256xi1> to vector<1x256xi1>
    %153 = vector.broadcast %152 : vector<1x256xi1> to vector<12x256xi1>
    %154 = vector.broadcast %cst_55 : f32 to vector<12x256xf32>
    %155 = arith.select %153, %151, %154 : vector<12x256xi1>, vector<12x256xf32>
    %156 = arith.addf %140, %155 : vector<12x256xf32>
    %c0_56 = arith.constant 0 : index
    %c0_57 = arith.constant 0 : index
    %157 = vector.load %arg2[%c0_56, %c0_57] : memref<12x256xf32, #tpu.memory_space<vmem>>, vector<12x256xf32>
    tpu.vector_store %arg2[%c0_56, %c0_57], %156 {strides = array<i32>} : memref<12x256xf32, #tpu.memory_space<vmem>>, vector<12x256xf32>,
    return
  }
}

</mosaic_0001>

<llo_original>
// kernel: tpu_custom_call.1
$region0: #{tpu_custom_call.1}
  #allocation0 [shape = 'u32[]', space=smem, size = 0x4, offset = 0x4, fixed_abs, tag = 'smem constant byte address 0x4 - core index']
  #allocation1 [shape = 'u32[144,128]{1,0:T(1,128)}', space=vmem, size = 0x12000, scoped, tag = 'internal scratch']
  %s0 = inlined_call_operand.vmem [shape: f32[12,19], index: 0, kind: input, shape index: {}]
  %s1 = inlined_call_operand.vmem [shape: f32[2,12,290], index: 1, kind: input, shape index: {}]
  %s2 = inlined_call_operand.hbm [shape: f32[12,256], index: 2, kind: output, shape index: {}]
  %s3 = sld [smem:[#allocation0]]
  $region18: #{tpu_custom_call.1} parent=0
    _
  %s5 = ssub.s32 1, %s3
  %s6 = scalar_select 0, %s5, %s3
  $region1: #{tpu_custom_call.1} parent=0
    #allocation2 [shape = 'u8[16384]{0}', space=vmem, size = 0x4000, scoped, tag = 'output window, operand 0, single buffered']
    #allocation3 [shape = 's32[1]{0}', space=sflag, size = 0x4, scoped, tag = 'scoped memory for tpu_custom_call.1']
    %7 = vsyncpa [#allocation3], 0
    // Predicated region
    $region2: #{tpu_custom_call.1} parent=1 // pred_check
      _
    $region3: #{tpu_custom_call.1} parent=1 // pred_check_branch
      %9 = sbr.rel (0) target = $region5
    $region4: #{tpu_custom_call.1} parent=1 // pred_region
      _
    $region5: #{tpu_custom_call.1} parent=1 // pred_fallthru
      _
    // Predicated region
    $region6: #{tpu_custom_call.1} parent=1 // pred_check
      _
    $region7: #{tpu_custom_call.1} parent=1 // pred_check_branch
      %11 = sbr.rel (0) target = $region9
    $region8: #{tpu_custom_call.1} parent=1 // pred_region
      _
    $region9: #{tpu_custom_call.1} parent=1 // pred_fallthru
      _
    %v12 = vld [vmem:[%s0] sm:$0xff]
    %v13 = vld [vmem:[%s0 + $0x8] sm:$0xf]
    %v14 = vlaneseq
    %v15 = vand.u32 %v14, 127
    %v16 = vadd.s32 %v15, 128
    %vm17 = vcmp.lt.s32.totalorder %v15, 0
    %v18 = vsub.s32 0, %v15
    %v19 = vsel %vm17, %v18, %v15
    %v20 = vshrl.u32 %v19, 4
    %v21 = vand.u32 %v19, 15
    %v22 = vsub.s32 0, %v21
    %v23 = vsel %vm17, %v22, %v21
    %vm24 = vcmp.lt.s32.totalorder %v16, 0
    %v25 = vsub.s32 0, %v16
    %v26 = vsel %vm24, %v25, %v16
    %v27 = vshrl.u32 %v26, 4
    %v28 = vand.u32 %v26, 15
    %v29 = vsub.s32 0, %v28
    %v30 = vsel %vm24, %v29, %v28
    %vm31 = vcmp.ne.s32.totalorder %v23, 0
    %vm32 = vcmp.ne.s32.totalorder %v30, 0
    %vm33 = vcmp.lt.s32.totalorder %v23, 0
    %vm34 = vcmp.lt.s32.totalorder %v30, 0
    %vm35 = vmand %vm33, %vm31
    %vm36 = vmand %vm34, %vm32
    %v37 = vadd.s32 %v23, 16
    %v38 = vadd.s32 %v30, 16
    %v39 = vsel %vm35, %v37, %v23
    %v40 = vsel %vm36, %v38, %v30
    %42 = vset.pattern.permute.xlu0 18
    %43 = vperm.xlu0 %42, %v12
    %v44 = vpop.permute.xlu0 %43
    %47 = vset.pattern.permute.xlu0 18
    %48 = vperm.xlu0 %47, %v13
    %v49 = vpop.permute.xlu0 %48
    %vm51 = vcmp.ge.s32.totalorder %v39, 1
    %vm52 = vcmp.ge.s32.totalorder %v40, 1
    %v53 = vld [vmem:[%s1] sm:$0xff]
    %v54 = vld [vmem:[%s1 + $0x8] sm:$0xff]
    %v55 = vld [vmem:[%s1 + $0x18] sm:$0xf]
    %v56 = vld [vmem:[%s1 + $0x20] sm:$0xf]
    %57 = vset.pattern.permute.xlu0 0
    %58 = vperm.xlu0 %57, %v12
    %v59 = vpop.permute.xlu0 %58
    %61 = vset.pattern.permute.xlu0 0
    %62 = vperm.xlu0 %61, %v13
    %v63 = vpop.permute.xlu0 %62
    %v65 = vmul.f32 %v53, %v59
    %v66 = vmul.f32 %v54, %v59
    %v67 = vmul.f32 %v55, %v63
    %v68 = vmul.f32 %v56, %v63
    %s69 = scalar_lea.vmem %s1, 48
    %v70 = vld [vmem:[%s69] sm:$0xff]
    %v71 = vld [vmem:[%s69 + $0x8] sm:$0xff]
    %v72 = vld [vmem:[%s69 + $0x18] sm:$0xf]
    %v73 = vld [vmem:[%s69 + $0x20] sm:$0xf]
    %74 = vset.pattern.permute.xlu0 1
    %75 = vperm.xlu0 %74, %v12
    %v76 = vpop.permute.xlu0 %75
    %78 = vset.pattern.permute.xlu0 1
    %79 = vperm.xlu0 %78, %v13
    %v80 = vpop.permute.xlu0 %79
    %v82 = vmul.f32 %v70, %v76
    %v83 = vmul.f32 %v71, %v76
    %v84 = vmul.f32 %v72, %v80
    %v85 = vmul.f32 %v73, %v80
    %v86 = vadd.f32 %v65, %v82
    %v87 = vadd.f32 %v66, %v83
    %v88 = vadd.f32 %v67, %v84
    %v89 = vadd.f32 %v68, %v85
    %v90 = vsel %vm51, 1, 0
    %v91 = vsel %vm52, 1, 0
    %vm92 = vcmp.eq.s32.totalorder %v90, 1
    %vm93 = vcmp.eq.s32.totalorder %v91, 1
    %v94 = vsel %vm92, %v86, 0.0
    %v95 = vsel %vm93, %v87, 0.0
    %v96 = vsel %vm92, %v88, 0.0
    %v97 = vsel %vm93, %v89, 0.0
    %v98 = vadd.f32 %v44, %v94
    %v99 = vadd.f32 %v44, %v95
    %v100 = vadd.f32 %v49, %v96
    %v101 = vadd.f32 %v49, %v97
    %v102 = vld [vmem:[%s1] sm:$0xff]
    %v103 = vld [vmem:[%s1 + $0x8] sm:$0xff]
    %v104 = vld [vmem:[%s1 + $0x10] sm:$0xff]
    %v105 = vld [vmem:[%s1 + $0x18] sm:$0xf]
    %v106 = vld [vmem:[%s1 + $0x20] sm:$0xf]
    %v107 = vld [vmem:[%s1 + $0x28] sm:$0xf]
    %108 = vset.pattern.permute.xlu0 6
    %109 = vperm.xlu0 %108, %v12
    %v110 = vpop.permute.xlu0 %109
    %112 = vset.pattern.permute.xlu0 6
    %113 = vperm.xlu0 %112, %v13
    %v114 = vpop.permute.xlu0 %113
    %v116 = vmul.f32 %v102, %v110
    %v117 = vmul.f32 %v103, %v110
    %v118 = vmul.f32 %v104, %v110
    %v119 = vmul.f32 %v105, %v114
    %v120 = vmul.f32 %v106, %v114
    %v121 = vmul.f32 %v107, %v114
    %v122 = vld [vmem:[%s69] sm:$0xff]
    %v123 = vld [vmem:[%s69 + $0x8] sm:$0xff]
    %v124 = vld [vmem:[%s69 + $0x10] sm:$0xff]
    %v125 = vld [vmem:[%s69 + $0x18] sm:$0xf]
    %v126 = vld [vmem:[%s69 + $0x20] sm:$0xf]
    %v127 = vld [vmem:[%s69 + $0x28] sm:$0xf]
    %128 = vset.pattern.permute.xlu0 7
    %129 = vperm.xlu0 %128, %v12
    %v130 = vpop.permute.xlu0 %129
    %132 = vset.pattern.permute.xlu0 7
    %133 = vperm.xlu0 %132, %v13
    %v134 = vpop.permute.xlu0 %133
    %v136 = vmul.f32 %v122, %v130
    %v137 = vmul.f32 %v123, %v130
    %v138 = vmul.f32 %v124, %v130
    %v139 = vmul.f32 %v125, %v134
    %v140 = vmul.f32 %v126, %v134
    %v141 = vmul.f32 %v127, %v134
    %v142 = vadd.f32 %v116, %v136
    %v143 = vadd.f32 %v117, %v137
    %v144 = vadd.f32 %v118, %v138
    %v145 = vadd.f32 %v119, %v139
    %v146 = vadd.f32 %v120, %v140
    %v147 = vadd.f32 %v121, %v141
    %154 = vrot.lane.b32.xlu0 %v142, 112
    %v155 = vpop.permute.xlu0 %154
    %156 = vrot.lane.b32.xlu0 %v143, 112
    %v157 = vpop.permute.xlu0 %156
    %158 = vrot.lane.b32.xlu0 %v144, 112
    %v159 = vpop.permute.xlu0 %158
    %160 = vrot.lane.b32.xlu0 %v145, 112
    %v161 = vpop.permute.xlu0 %160
    %162 = vrot.lane.b32.xlu0 %v146, 112
    %v163 = vpop.permute.xlu0 %162
    %164 = vrot.lane.b32.xlu0 %v147, 112
    %v165 = vpop.permute.xlu0 %164
    %vm166 = vcmask 916480
    %v167 = vsel %vm166, %v155, %v157
    %v168 = vsel %vm166, %v157, %v159
    %v169 = vsel %vm166, %v161, %v163
    %v170 = vsel %vm166, %v163, %v165
    %v175 = vsel %vm92, %v167, 0.0
    %v176 = vsel %vm93, %v168, 0.0
    %v177 = vsel %vm92, %v169, 0.0
    %v178 = vsel %vm93, %v170, 0.0
    %v179 = vadd.f32 %v98, %v175
    %v180 = vadd.f32 %v99, %v176
    %v181 = vadd.f32 %v100, %v177
    %v182 = vadd.f32 %v101, %v178
    %183 = vset.pattern.permute.xlu0 12
    %184 = vperm.xlu0 %183, %v12
    %v185 = vpop.permute.xlu0 %184
    %187 = vset.pattern.permute.xlu0 12
    %188 = vperm.xlu0 %187, %v13
    %v189 = vpop.permute.xlu0 %188
    %v191 = vmul.f32 %v102, %v185
    %v192 = vmul.f32 %v103, %v185
    %v193 = vmul.f32 %v104, %v185
    %v194 = vmul.f32 %v105, %v189
    %v195 = vmul.f32 %v106, %v189
    %v196 = vmul.f32 %v107, %v189
    %197 = vset.pattern.permute.xlu0 13
    %198 = vperm.xlu0 %197, %v12
    %v199 = vpop.permute.xlu0 %198
    %201 = vset.pattern.permute.xlu0 13
    %202 = vperm.xlu0 %201, %v13
    %v203 = vpop.permute.xlu0 %202
    %v205 = vmul.f32 %v122, %v199
    %v206 = vmul.f32 %v123, %v199
    %v207 = vmul.f32 %v124, %v199
    %v208 = vmul.f32 %v125, %v203
    %v209 = vmul.f32 %v126, %v203
    %v210 = vmul.f32 %v127, %v203
    %v211 = vadd.f32 %v191, %v205
    %v212 = vadd.f32 %v192, %v206
    %v213 = vadd.f32 %v193, %v207
    %v214 = vadd.f32 %v194, %v208
    %v215 = vadd.f32 %v195, %v209
    %v216 = vadd.f32 %v196, %v210
    %223 = vrot.lane.b32.xlu0 %v211, 96
    %v224 = vpop.permute.xlu0 %223
    %225 = vrot.lane.b32.xlu0 %v212, 96
    %v226 = vpop.permute.xlu0 %225
    %227 = vrot.lane.b32.xlu0 %v213, 96
    %v228 = vpop.permute.xlu0 %227
    %229 = vrot.lane.b32.xlu0 %v214, 96
    %v230 = vpop.permute.xlu0 %229
    %231 = vrot.lane.b32.xlu0 %v215, 96
    %v232 = vpop.permute.xlu0 %231
    %233 = vrot.lane.b32.xlu0 %v216, 96
    %v234 = vpop.permute.xlu0 %233
    %vm235 = vcmask 785408
    %v236 = vsel %vm235, %v224, %v226
    %v237 = vsel %vm235, %v226, %v228
    %v238 = vsel %vm235, %v230, %v232
    %v239 = vsel %vm235, %v232, %v234
    %v244 = vsel %vm92, %v236, 0.0
    %v245 = vsel %vm93, %v237, 0.0
    %v246 = vsel %vm92, %v238, 0.0
    %v247 = vsel %vm93, %v239, 0.0
    %v248 = vadd.f32 %v179, %v244
    %v249 = vadd.f32 %v180, %v245
    %v250 = vadd.f32 %v181, %v246
    %v251 = vadd.f32 %v182, %v247
    %252 = vset.pattern.permute.xlu0 2
    %253 = vperm.xlu0 %252, %v12
    %v254 = vpop.permute.xlu0 %253
    %256 = vset.pattern.permute.xlu0 2
    %257 = vperm.xlu0 %256, %v13
    %v258 = vpop.permute.xlu0 %257
    %v260 = vmul.f32 %v102, %v254
    %v261 = vmul.f32 %v103, %v254
    %v262 = vmul.f32 %v104, %v254
    %v263 = vmul.f32 %v105, %v258
    %v264 = vmul.f32 %v106, %v258
    %v265 = vmul.f32 %v107, %v258
    %266 = vset.pattern.permute.xlu0 3
    %267 = vperm.xlu0 %266, %v12
    %v268 = vpop.permute.xlu0 %267
    %270 = vset.pattern.permute.xlu0 3
    %271 = vperm.xlu0 %270, %v13
    %v272 = vpop.permute.xlu0 %271
    %v274 = vmul.f32 %v122, %v268
    %v275 = vmul.f32 %v123, %v268
    %v276 = vmul.f32 %v124, %v268
    %v277 = vmul.f32 %v125, %v272
    %v278 = vmul.f32 %v126, %v272
    %v279 = vmul.f32 %v127, %v272
    %v280 = vadd.f32 %v260, %v274
    %v281 = vadd.f32 %v261, %v275
    %v282 = vadd.f32 %v262, %v276
    %v283 = vadd.f32 %v263, %v277
    %v284 = vadd.f32 %v264, %v278
    %v285 = vadd.f32 %v265, %v279
    %292 = vrot.lane.b32.xlu0 %v280, 127
    %v293 = vpop.permute.xlu0 %292
    %294 = vrot.lane.b32.xlu0 %v281, 127
    %v295 = vpop.permute.xlu0 %294
    %296 = vrot.lane.b32.xlu0 %v282, 127
    %v297 = vpop.permute.xlu0 %296
    %298 = vrot.lane.b32.xlu0 %v283, 127
    %v299 = vpop.permute.xlu0 %298
    %300 = vrot.lane.b32.xlu0 %v284, 127
    %v301 = vpop.permute.xlu0 %300
    %302 = vrot.lane.b32.xlu0 %v285, 127
    %v303 = vpop.permute.xlu0 %302
    %vm304 = vcmask 1039360
    %v305 = vsel %vm304, %v293, %v295
    %v306 = vsel %vm304, %v295, %v297
    %v307 = vsel %vm304, %v299, %v301
    %v308 = vsel %vm304, %v301, %v303
    %v313 = vadd.f32 %v248, %v305
    %v314 = vadd.f32 %v249, %v306
    %v315 = vadd.f32 %v250, %v307
    %v316 = vadd.f32 %v251, %v308
    %317 = vset.pattern.permute.xlu0 8
    %318 = vperm.xlu0 %317, %v12
    %v319 = vpop.permute.xlu0 %318
    %321 = vset.pattern.permute.xlu0 8
    %322 = vperm.xlu0 %321, %v13
    %v323 = vpop.permute.xlu0 %322
    %v325 = vmul.f32 %v102, %v319
    %v326 = vmul.f32 %v103, %v319
    %v327 = vmul.f32 %v104, %v319
    %v328 = vmul.f32 %v105, %v323
    %v329 = vmul.f32 %v106, %v323
    %v330 = vmul.f32 %v107, %v323
    %331 = vset.pattern.permute.xlu0 9
    %332 = vperm.xlu0 %331, %v12
    %v333 = vpop.permute.xlu0 %332
    %335 = vset.pattern.permute.xlu0 9
    %336 = vperm.xlu0 %335, %v13
    %v337 = vpop.permute.xlu0 %336
    %v339 = vmul.f32 %v122, %v333
    %v340 = vmul.f32 %v123, %v333
    %v341 = vmul.f32 %v124, %v333
    %v342 = vmul.f32 %v125, %v337
    %v343 = vmul.f32 %v126, %v337
    %v344 = vmul.f32 %v127, %v337
    %v345 = vadd.f32 %v325, %v339
    %v346 = vadd.f32 %v326, %v340
    %v347 = vadd.f32 %v327, %v341
    %v348 = vadd.f32 %v328, %v342
    %v349 = vadd.f32 %v329, %v343
    %v350 = vadd.f32 %v330, %v344
    %357 = vrot.lane.b32.xlu0 %v345, 111
    %v358 = vpop.permute.xlu0 %357
    %359 = vrot.lane.b32.xlu0 %v346, 111
    %v360 = vpop.permute.xlu0 %359
    %361 = vrot.lane.b32.xlu0 %v347, 111
    %v362 = vpop.permute.xlu0 %361
    %363 = vrot.lane.b32.xlu0 %v348, 111
    %v364 = vpop.permute.xlu0 %363
    %365 = vrot.lane.b32.xlu0 %v349, 111
    %v366 = vpop.permute.xlu0 %365
    %367 = vrot.lane.b32.xlu0 %v350, 111
    %v368 = vpop.permute.xlu0 %367
    %vm369 = vcmask 908288
    %v370 = vsel %vm369, %v358, %v360
    %v371 = vsel %vm369, %v360, %v362
    %v372 = vsel %vm369, %v364, %v366
    %v373 = vsel %vm369, %v366, %v368
    %v378 = vadd.f32 %v313, %v370
    %v379 = vadd.f32 %v314, %v371
    %v380 = vadd.f32 %v315, %v372
    %v381 = vadd.f32 %v316, %v373
    %382 = vset.pattern.permute.xlu0 14
    %383 = vperm.xlu0 %382, %v12
    %v384 = vpop.permute.xlu0 %383
    %386 = vset.pattern.permute.xlu0 14
    %387 = vperm.xlu0 %386, %v13
    %v388 = vpop.permute.xlu0 %387
    %v390 = vmul.f32 %v102, %v384
    %v391 = vmul.f32 %v103, %v384
    %v392 = vmul.f32 %v104, %v384
    %v393 = vmul.f32 %v105, %v388
    %v394 = vmul.f32 %v106, %v388
    %v395 = vmul.f32 %v107, %v388
    %396 = vset.pattern.permute.xlu0 15
    %397 = vperm.xlu0 %396, %v12
    %v398 = vpop.permute.xlu0 %397
    %400 = vset.pattern.permute.xlu0 15
    %401 = vperm.xlu0 %400, %v13
    %v402 = vpop.permute.xlu0 %401
    %v404 = vmul.f32 %v122, %v398
    %v405 = vmul.f32 %v123, %v398
    %v406 = vmul.f32 %v124, %v398
    %v407 = vmul.f32 %v125, %v402
    %v408 = vmul.f32 %v126, %v402
    %v409 = vmul.f32 %v127, %v402
    %v410 = vadd.f32 %v390, %v404
    %v411 = vadd.f32 %v391, %v405
    %v412 = vadd.f32 %v392, %v406
    %v413 = vadd.f32 %v393, %v407
    %v414 = vadd.f32 %v394, %v408
    %v415 = vadd.f32 %v395, %v409
    %422 = vrot.lane.b32.xlu0 %v410, 95
    %v423 = vpop.permute.xlu0 %422
    %424 = vrot.lane.b32.xlu0 %v411, 95
    %v425 = vpop.permute.xlu0 %424
    %426 = vrot.lane.b32.xlu0 %v412, 95
    %v427 = vpop.permute.xlu0 %426
    %428 = vrot.lane.b32.xlu0 %v413, 95
    %v429 = vpop.permute.xlu0 %428
    %430 = vrot.lane.b32.xlu0 %v414, 95
    %v431 = vpop.permute.xlu0 %430
    %432 = vrot.lane.b32.xlu0 %v415, 95
    %v433 = vpop.permute.xlu0 %432
    %vm434 = vcmask 777216
    %v435 = vsel %vm434, %v423, %v425
    %v436 = vsel %vm434, %v425, %v427
    %v437 = vsel %vm434, %v429, %v431
    %v438 = vsel %vm434, %v431, %v433
    %v443 = vadd.f32 %v378, %v435
    %v444 = vadd.f32 %v379, %v436
    %v445 = vadd.f32 %v380, %v437
    %v446 = vadd.f32 %v381, %v438
    %vm447 = vcmp.lt.s32.totalorder %v39, 15
    %vm448 = vcmp.lt.s32.totalorder %v40, 15
    %449 = vset.pattern.permute.xlu0 4
    %450 = vperm.xlu0 %449, %v12
    %v451 = vpop.permute.xlu0 %450
    %453 = vset.pattern.permute.xlu0 4
    %454 = vperm.xlu0 %453, %v13
    %v455 = vpop.permute.xlu0 %454
    %v457 = vmul.f32 %v102, %v451
    %v458 = vmul.f32 %v103, %v451
    %v459 = vmul.f32 %v104, %v451
    %v460 = vmul.f32 %v105, %v455
    %v461 = vmul.f32 %v106, %v455
    %v462 = vmul.f32 %v107, %v455
    %463 = vset.pattern.permute.xlu0 5
    %464 = vperm.xlu0 %463, %v12
    %v465 = vpop.permute.xlu0 %464
    %467 = vset.pattern.permute.xlu0 5
    %468 = vperm.xlu0 %467, %v13
    %v469 = vpop.permute.xlu0 %468
    %v471 = vmul.f32 %v122, %v465
    %v472 = vmul.f32 %v123, %v465
    %v473 = vmul.f32 %v124, %v465
    %v474 = vmul.f32 %v125, %v469
    %v475 = vmul.f32 %v126, %v469
    %v476 = vmul.f32 %v127, %v469
    %v477 = vadd.f32 %v457, %v471
    %v478 = vadd.f32 %v458, %v472
    %v479 = vadd.f32 %v459, %v473
    %v480 = vadd.f32 %v460, %v474
    %v481 = vadd.f32 %v461, %v475
    %v482 = vadd.f32 %v462, %v476
    %v483 = vsel %vm447, 1, 0
    %v484 = vsel %vm448, 1, 0
    %vm485 = vcmp.eq.s32.totalorder %v483, 1
    %vm486 = vcmp.eq.s32.totalorder %v484, 1
    %493 = vrot.lane.b32.xlu0 %v477, 126
    %v494 = vpop.permute.xlu0 %493
    %495 = vrot.lane.b32.xlu0 %v478, 126
    %v496 = vpop.permute.xlu0 %495
    %497 = vrot.lane.b32.xlu0 %v479, 126
    %v498 = vpop.permute.xlu0 %497
    %499 = vrot.lane.b32.xlu0 %v480, 126
    %v500 = vpop.permute.xlu0 %499
    %501 = vrot.lane.b32.xlu0 %v481, 126
    %v502 = vpop.permute.xlu0 %501
    %503 = vrot.lane.b32.xlu0 %v482, 126
    %v504 = vpop.permute.xlu0 %503
    %vm505 = vcmask 1031168
    %v506 = vsel %vm505, %v494, %v496
    %v507 = vsel %vm505, %v496, %v498
    %v508 = vsel %vm505, %v500, %v502
    %v509 = vsel %vm505, %v502, %v504
    %v514 = vsel %vm485, %v506, 0.0
    %v515 = vsel %vm486, %v507, 0.0
    %v516 = vsel %vm485, %v508, 0.0
    %v517 = vsel %vm486, %v509, 0.0
    %v518 = vadd.f32 %v443, %v514
    %v519 = vadd.f32 %v444, %v515
    %v520 = vadd.f32 %v445, %v516
    %v521 = vadd.f32 %v446, %v517
    %522 = vset.pattern.permute.xlu0 10
    %523 = vperm.xlu0 %522, %v12
    %v524 = vpop.permute.xlu0 %523
    %526 = vset.pattern.permute.xlu0 10
    %527 = vperm.xlu0 %526, %v13
    %v528 = vpop.permute.xlu0 %527
    %v530 = vmul.f32 %v102, %v524
    %v531 = vmul.f32 %v103, %v524
    %v532 = vmul.f32 %v104, %v524
    %v533 = vmul.f32 %v105, %v528
    %v534 = vmul.f32 %v106, %v528
    %v535 = vmul.f32 %v107, %v528
    %536 = vset.pattern.permute.xlu0 11
    %537 = vperm.xlu0 %536, %v12
    %v538 = vpop.permute.xlu0 %537
    %540 = vset.pattern.permute.xlu0 11
    %541 = vperm.xlu0 %540, %v13
    %v542 = vpop.permute.xlu0 %541
    %v544 = vmul.f32 %v122, %v538
    %v545 = vmul.f32 %v123, %v538
    %v546 = vmul.f32 %v124, %v538
    %v547 = vmul.f32 %v125, %v542
    %v548 = vmul.f32 %v126, %v542
    %v549 = vmul.f32 %v127, %v542
    %v550 = vadd.f32 %v530, %v544
    %v551 = vadd.f32 %v531, %v545
    %v552 = vadd.f32 %v532, %v546
    %v553 = vadd.f32 %v533, %v547
    %v554 = vadd.f32 %v534, %v548
    %v555 = vadd.f32 %v535, %v549
    %562 = vrot.lane.b32.xlu0 %v550, 110
    %v563 = vpop.permute.xlu0 %562
    %564 = vrot.lane.b32.xlu0 %v551, 110
    %v565 = vpop.permute.xlu0 %564
    %566 = vrot.lane.b32.xlu0 %v552, 110
    %v567 = vpop.permute.xlu0 %566
    %568 = vrot.lane.b32.xlu0 %v553, 110
    %v569 = vpop.permute.xlu0 %568
    %570 = vrot.lane.b32.xlu0 %v554, 110
    %v571 = vpop.permute.xlu0 %570
    %572 = vrot.lane.b32.xlu0 %v555, 110
    %v573 = vpop.permute.xlu0 %572
    %vm574 = vcmask 900096
    %v575 = vsel %vm574, %v563, %v565
    %v576 = vsel %vm574, %v565, %v567
    %v577 = vsel %vm574, %v569, %v571
    %v578 = vsel %vm574, %v571, %v573
    %v583 = vsel %vm485, %v575, 0.0
    %v584 = vsel %vm486, %v576, 0.0
    %v585 = vsel %vm485, %v577, 0.0
    %v586 = vsel %vm486, %v578, 0.0
    %v587 = vadd.f32 %v518, %v583
    %v588 = vadd.f32 %v519, %v584
    %v589 = vadd.f32 %v520, %v585
    %v590 = vadd.f32 %v521, %v586
    %591 = vset.pattern.permute.xlu0 16
    %592 = vperm.xlu0 %591, %v12
    %v593 = vpop.permute.xlu0 %592
    %595 = vset.pattern.permute.xlu0 16
    %596 = vperm.xlu0 %595, %v13
    %v597 = vpop.permute.xlu0 %596
    %v599 = vmul.f32 %v102, %v593
    %v600 = vmul.f32 %v103, %v593
    %v601 = vmul.f32 %v104, %v593
    %v602 = vmul.f32 %v105, %v597
    %v603 = vmul.f32 %v106, %v597
    %v604 = vmul.f32 %v107, %v597
    %605 = vset.pattern.permute.xlu0 17
    %606 = vperm.xlu0 %605, %v12
    %v607 = vpop.permute.xlu0 %606
    %609 = vset.pattern.permute.xlu0 17
    %610 = vperm.xlu0 %609, %v13
    %v611 = vpop.permute.xlu0 %610
    %v613 = vmul.f32 %v122, %v607
    %v614 = vmul.f32 %v123, %v607
    %v615 = vmul.f32 %v124, %v607
    %v616 = vmul.f32 %v125, %v611
    %v617 = vmul.f32 %v126, %v611
    %v618 = vmul.f32 %v127, %v611
    %v619 = vadd.f32 %v599, %v613
    %v620 = vadd.f32 %v600, %v614
    %v621 = vadd.f32 %v601, %v615
    %v622 = vadd.f32 %v602, %v616
    %v623 = vadd.f32 %v603, %v617
    %v624 = vadd.f32 %v604, %v618
    %631 = vrot.lane.b32.xlu0 %v619, 94
    %v632 = vpop.permute.xlu0 %631
    %633 = vrot.lane.b32.xlu0 %v620, 94
    %v634 = vpop.permute.xlu0 %633
    %635 = vrot.lane.b32.xlu0 %v621, 94
    %v636 = vpop.permute.xlu0 %635
    %637 = vrot.lane.b32.xlu0 %v622, 94
    %v638 = vpop.permute.xlu0 %637
    %639 = vrot.lane.b32.xlu0 %v623, 94
    %v640 = vpop.permute.xlu0 %639
    %641 = vrot.lane.b32.xlu0 %v624, 94
    %v642 = vpop.permute.xlu0 %641
    %vm643 = vcmask 769024
    %v644 = vsel %vm643, %v632, %v634
    %v645 = vsel %vm643, %v634, %v636
    %v646 = vsel %vm643, %v638, %v640
    %v647 = vsel %vm643, %v640, %v642
    %v652 = vsel %vm485, %v644, 0.0
    %v653 = vsel %vm486, %v645, 0.0
    %v654 = vsel %vm485, %v646, 0.0
    %v655 = vsel %vm486, %v647, 0.0
    %v656 = vadd.f32 %v587, %v652
    %v657 = vadd.f32 %v588, %v653
    %v658 = vadd.f32 %v589, %v654
    %v659 = vadd.f32 %v590, %v655
    %660 = vst [vmem:[#allocation2] sm:$0xff] %v656
    %661 = vst [vmem:[#allocation2 + $0x8] sm:$0xff] %v657
    %662 = vst [vmem:[#allocation2 + $0x10] sm:$0xf] %v658
    %663 = vst [vmem:[#allocation2 + $0x18] sm:$0xf] %v659
    // Predicated region
    $region10: #{tpu_custom_call.1} parent=1 // pred_check
      _
    $region11: #{tpu_custom_call.1} parent=1 // pred_check_branch
      %665 = sbr.rel (0) target = $region13
    $region12: #{tpu_custom_call.1} parent=1 // pred_region
      %s667 = ssub.s32 512, 512
      %668 = vsyncadd [#allocation3], %s667
      %s669 = sshll.u32 [#allocation2], 4
      %s670 = int_to_ptr.vmem [resolvable:$true] %s669
      %675 = dma.vmem_to_hbm [thread:$0]  %s670, 512, %s2, [#allocation3], 256, 256, 16
    $region13: #{tpu_custom_call.1} parent=1 // pred_fallthru
      _
    // Predicated region
    $region14: #{tpu_custom_call.1} parent=1 // pred_check
      _
    $region15: #{tpu_custom_call.1} parent=1 // pred_check_branch
      %677 = sbr.rel (0) target = $region17
    $region16: #{tpu_custom_call.1} parent=1 // pred_region
      %678 = dma.done [#allocation3], 512
    $region17: #{tpu_custom_call.1} parent=1 // pred_fallthru
      _
    %679 = vsyncpa [#allocation3], 1

</llo_original>
